<compile_context>
chip_gen: v5e
topology: v5e:2x2
jax: 0.10.0
libtpu: 0.0.40
codegen_flags: <defaults>
</compile_context>

<pallas_src>
import numpy as np
import jax
import jax.numpy as jnp
from jax.experimental import pallas as pl
from jax.experimental.pallas import tpu as pltpu


# ----------------------------------------------------------------------------
# Host-side glue: faithful port of detector_segmentation / weight_segments
# ----------------------------------------------------------------------------
def detector_segmentation(num_classes, detector_shape, segmentation_type="strips"):
    """Markup the detector plane into class strips (port of the torch code)."""
    detector_y, detector_x = detector_shape
    markup = -1 * np.ones(detector_shape, dtype=np.int32)
    if segmentation_type == "strips":
        if num_classes % 2 == 0:
            central_class = 0
            if detector_x % 2 == 0:
                x_center_left_ind = detector_x // 2
                x_center_right_ind = x_center_left_ind
                strip_width = detector_x // num_classes
            else:
                x_center_left_ind = detector_x // 2
                x_center_right_ind = x_center_left_ind + 1
                strip_width = (detector_x - 1) // num_classes
        else:
            central_class = 1
            strip_width = detector_x // num_classes
            if detector_x % 2 == 0:
                if strip_width % 2 == 0:
                    x_center_left_ind = detector_x // 2 - strip_width // 2
                    x_center_right_ind = detector_x // 2 + strip_width // 2
                else:
                    center_strip_width = strip_width + 1
                    x_center_left_ind = detector_x // 2 - center_strip_width // 2
                    x_center_right_ind = detector_x // 2 + center_strip_width // 2
                    strip_width = x_center_left_ind // (num_classes // 2)
            elif strip_width % 2 == 0:
                center_strip_width = strip_width + 1
                x_center_left_ind = detector_x // 2 - center_strip_width // 2
                x_center_right_ind = detector_x // 2 + 1 + center_strip_width // 2
                strip_width = x_center_left_ind // (num_classes // 2)
            else:
                x_center_left_ind = detector_x // 2 - strip_width // 2
                x_center_right_ind = detector_x // 2 + 1 + strip_width // 2
            ind_central_class = num_classes // 2
            markup[:, x_center_left_ind:x_center_right_ind] = ind_central_class
        for ind in range(num_classes // 2):
            ind_class = num_classes // 2 - 1 - ind
            left = x_center_left_ind - strip_width * (ind + 1)
            right = x_center_left_ind - strip_width * ind
            assert np.all(markup[:, left:right] == -1)
            markup[:, left:right] = ind_class
        for ind in range(num_classes // 2):
            ind_class = ind + num_classes // 2 + central_class
            left = x_center_right_ind + strip_width * ind
            right = x_center_right_ind + strip_width * (ind + 1)
            assert np.all(markup[:, left:right] == -1)
            markup[:, left:right] = ind_class
    return markup


def weight_segments(num_classes, segmented_detector):
    """weight_i * area_i = const  -> weights = min_area / areas, shape (1, C)."""
    areas = np.zeros((1, num_classes), dtype=np.float32)
    for c in range(num_classes):
        areas[0, c] = np.sum(segmented_detector == c)
    min_area = areas.min()
    return (min_area / areas).astype(np.float32)


def build_weighted_onehot(markup, weights, lane_pad=128):
    """Fold markup + segment weights into a (W, C_pad) f32 column one-hot.

    Valid for 'strips' markups (constant along rows).  Unassigned (-1) columns
    get an all-zero row, so they never contribute to any class integral.
    """
    H, W = markup.shape
    C = weights.shape[1]
    c_pad = max(lane_pad, ((C + lane_pad - 1) // lane_pad) * lane_pad)
    col = markup[0, :]
    if not np.all(markup == col[None, :]):
        # TODO(synk): general (non-strip) markups need a per-pixel [H*W, C] one-hot path.
        raise NotImplementedError("only row-constant ('strips') markups are supported")
    onehot = np.zeros((W, c_pad), dtype=np.float32)
    for c in range(C):
        onehot[col == c, c] = weights[0, c]
    return onehot


def _choose_tile_rows(H, W, itemsize=4, tile_budget_bytes=8 * 1024 * 1024):
    """Row tile that divides H, is a multiple of 8, and fits the VMEM budget
    when double-buffered (conservative for v5e's 16 MiB scoped default)."""
    max_rows = tile_budget_bytes // (2 * W * itemsize)
    if H <= max_rows:
        return H
    max_rows = max(8, (max_rows // 8) * 8)
    th = max_rows
    while th >= 8:
        if H % th == 0:
            return th
        th -= 8
    return H  # fallback: single monolithic block


# ----------------------------------------------------------------------------
# Pallas kernel: row-tiled column-sum accumulation, final tiny MXU projection
# ----------------------------------------------------------------------------
def _clf_kernel(data_ref, onehot_ref, out_ref, colsum_ref):
    i = pl.program_id(0)

    @pl.when(i == 0)
    def _():
        colsum_ref[...] = jnp.zeros_like(colsum_ref)
        out_ref[...] = jnp.zeros_like(out_ref)

    # Per-tile work is a pure VPU sublane reduction: (TH, W) -> (1, W).
    # No per-tile MXU matmul, no (TH, C_pad) intermediates -> DMA-bound kernel.
    data = data_ref[...].astype(jnp.float32)                       # (TH, W)
    colsum_ref[...] += jnp.sum(data, axis=0, keepdims=True)        # (1, W)

    @pl.when(i == pl.num_programs(0) - 1)
    def _():
        # One tiny MXU matmul projects column sums onto weighted class lanes.
        weighted = jnp.dot(colsum_ref[...], onehot_ref[...],
                           preferred_element_type=jnp.float32)     # (1, C_pad)
        # Padded lanes of the one-hot are exactly zero -> do not affect total.
        total = jnp.sum(weighted, axis=-1, keepdims=True)
        # Note: matches PyTorch semantics; produces NaN/Inf if the weighted
        # integrals sum to zero (same as the reference module).
        out_ref[...] = weighted / total


def detector_processor_clf(detector_data, weighted_onehot, num_classes, *, tile_rows=None):
    """Forward pass.  detector_data: (H, W); weighted_onehot: (W, C_pad) f32.
    Returns (1, num_classes) f32 probabilities."""
    H, W = detector_data.shape
    W_o, c_pad = weighted_onehot.shape
    assert W_o == W and c_pad % 128 == 0

    if tile_rows is None:
        tile_rows = _choose_tile_rows(H, W, detector_data.dtype.itemsize)
    assert tile_rows == H or (H % tile_rows == 0 and tile_rows % 8 == 0)
    grid = (H // tile_rows,)

    out = pl.pallas_call(
        _clf_kernel,
        out_shape=jax.ShapeDtypeStruct((1, c_pad), jnp.float32),
        grid=grid,
        in_specs=[
            # Row tile of the detector image; auto-pipelined across the grid.
            pl.BlockSpec((tile_rows, W), lambda i: (i, 0)),
            # Static weighted one-hot; constant index_map -> fetched once.
            pl.BlockSpec((W, c_pad), lambda i: (0, 0)),
        ],
        # Lane-dense (1, 128*k) output, resident across the whole grid.
        out_specs=pl.BlockSpec((1, c_pad), lambda i: (0, 0)),
        scratch_shapes=[pltpu.VMEM((1, W), jnp.float32)],
        compiler_params=pltpu.CompilerParams(
            # Accumulator is carried across the row-tile axis -> "arbitrary".
            dimension_semantics=("arbitrary",)
        ),
    )(detector_data, weighted_onehot)
    return out[:, :num_classes]


# ----------------------------------------------------------------------------
# Pure-JAX reference (mirrors the PyTorch forward) for verification
# ----------------------------------------------------------------------------
def reference_forward(detector_data, segmented_detector, segments_weights):
    C = segments_weights.shape[1]
    integrals = []
    for c in range(C):
        mask_c = jnp.where(segmented_detector == c, 1.0, 0.0)
        integrals.append(jnp.sum(detector_data.astype(jnp.float32) * mask_c))
    integrals = jnp.stack(integrals)[None, :] * segments_weights
    return integrals / jnp.sum(integrals)


if __name__ == "__main__":
    num_classes = 5          # odd -> center strip wider -> non-trivial weights
    H, W = 256, 128          # small detector plane

    # Deterministic synthetic detector image (intensity on the detector).
    key = jax.random.PRNGKey(0)
    detector_data = jax.random.uniform(key, (H, W), dtype=jnp.float32)

    # Module __init__ / lazy-init equivalents (host-side, static state).
    markup_np = detector_segmentation(num_classes, (H, W), segmentation_type="strips")
    weights_np = weight_segments(num_classes, markup_np)
    onehot_np = build_weighted_onehot(markup_np, weights_np)

    weighted_onehot = jnp.asarray(onehot_np, dtype=jnp.float32)

    # tile_rows=64 -> grid=(4,) to exercise the pipelined accumulation path.
    out = detector_processor_clf(detector_data, weighted_onehot, num_classes, tile_rows=64)
    out = jax.block_until_ready(out)

    ref = reference_forward(
        detector_data,
        jnp.asarray(markup_np, dtype=jnp.int32),
        jnp.asarray(weights_np, dtype=jnp.float32),
    )
    np.testing.assert_allclose(np.asarray(out), np.asarray(ref), rtol=1e-3, atol=1e-6)
    assert out.shape == (1, num_classes)
    assert abs(float(np.asarray(out).sum()) - 1.0) < 1e-4

    print("KERNEL_OK")
</pallas_src>

<mosaic_0001>
module attributes {stable_mosaic.version = 11 : i64} {
  func.func @_clf_kernel(%arg0: i32, %arg1: memref<64x128xf32, #tpu.memory_space<vmem>>, %arg2: memref<128x128xf32, #tpu.memory_space<vmem>>, %arg3: memref<1x128xf32, #tpu.memory_space<vmem>>, %arg4: memref<1x128xf32, #tpu.memory_space<vmem>>) attributes {dimension_semantics = [#tpu.dimension_semantics<arbitrary>], iteration_bounds = array<i64: 4>, scalar_prefetch = 0 : i64, scratch_operands = 1 : i64, tpu.core_type = #tpu.core_type<tc>, window_params = [{transform_indices = @transform_0, window_bounds = array<i64: 64, 128>}, {pipeline_mode = #tpu.pipeline_mode<synchronous>, transform_indices = @transform_1, window_bounds = array<i64: 128, 128>}, {pipeline_mode = #tpu.pipeline_mode<synchronous>, transform_indices = @transform_2, window_bounds = array<i64: 1, 128>}]} {
    %c0_i32 = arith.constant 0 : i32
    %0 = arith.cmpi eq, %arg0, %c0_i32 : i32
    %1 = arith.extui %0 : i1 to i32
    %c0_i32_0 = arith.constant 0 : i32
    %2 = arith.cmpi ne, %1, %c0_i32_0 : i32
    scf.if %2 {
      %cst_7 = arith.constant 0.000000e+00 : f32
      %12 = vector.broadcast %cst_7 : f32 to vector<1x128xf32>
      %c0_8 = arith.constant 0 : index
      %c0_9 = arith.constant 0 : index
      %13 = vector.load %arg4[%c0_8, %c0_9] : memref<1x128xf32, #tpu.memory_space<vmem>>, vector<1x128xf32>
      tpu.vector_store %arg4[%c0_8, %c0_9], %12 {strides = array<i32>} : memref<1x128xf32, #tpu.memory_space<vmem>>, vector<1x128xf32>,
      %cst_10 = arith.constant 0.000000e+00 : f32
      %14 = vector.broadcast %cst_10 : f32 to vector<1x128xf32>
      %c0_11 = arith.constant 0 : index
      %c0_12 = arith.constant 0 : index
      %15 = vector.load %arg3[%c0_11, %c0_12] : memref<1x128xf32, #tpu.memory_space<vmem>>, vector<1x128xf32>
      tpu.vector_store %arg3[%c0_11, %c0_12], %14 {strides = array<i32>} : memref<1x128xf32, #tpu.memory_space<vmem>>, vector<1x128xf32>,
    } else {
    }
    %c0 = arith.constant 0 : index
    %c0_1 = arith.constant 0 : index
    %3 = vector.load %arg1[%c0, %c0_1] : memref<64x128xf32, #tpu.memory_space<vmem>>, vector<64x128xf32>
    %c0_2 = arith.constant 0 : index
    %c0_3 = arith.constant 0 : index
    %4 = vector.load %arg4[%c0_2, %c0_3] : memref<1x128xf32, #tpu.memory_space<vmem>>, vector<1x128xf32>
    %cst = arith.constant dense<0.000000e+00> : vector<128xf32>
    %5 = vector.multi_reduction <add>, %3, %cst [0] : vector<64x128xf32> to vector<128xf32>
    %6 = vector.shape_cast %5 : vector<128xf32> to vector<1x128xf32>
    %7 = arith.addf %4, %6 : vector<1x128xf32>
    %c0_4 = arith.constant 0 : index
    %c0_5 = arith.constant 0 : index
    %8 = vector.load %arg4[%c0_4, %c0_5] : memref<1x128xf32, #tpu.memory_space<vmem>>, vector<1x128xf32>
    tpu.vector_store %arg4[%c0_4, %c0_5], %7 {strides = array<i32>} : memref<1x128xf32, #tpu.memory_space<vmem>>, vector<1x128xf32>,
    %c3_i32 = arith.constant 3 : i32
    %9 = arith.cmpi eq, %arg0, %c3_i32 : i32
    %10 = arith.extui %9 : i1 to i32
    %c0_i32_6 = arith.constant 0 : i32
    %11 = arith.cmpi ne, %10, %c0_i32_6 : i32
    scf.if %11 {
      %c0_7 = arith.constant 0 : index
      %c0_8 = arith.constant 0 : index
      %12 = vector.load %arg4[%c0_7, %c0_8] : memref<1x128xf32, #tpu.memory_space<vmem>>, vector<1x128xf32>
      %c0_9 = arith.constant 0 : index
      %c0_10 = arith.constant 0 : index
      %13 = vector.load %arg2[%c0_9, %c0_10] : memref<128x128xf32, #tpu.memory_space<vmem>>, vector<128x128xf32>
      %cst_11 = arith.constant dense<0.000000e+00> : vector<1x128xf32>
      %14 = tpu.matmul %12, %13, %cst_11 {dimension_numbers = #tpu.dot_dimension_numbers<[1], [0], [0], [1], [0, 0, 1, 1], [], []>} : vector<1x128xf32>, vector<128x128xf32>, vector<1x128xf32> -> vector<1x128xf32>
      %cst_12 = arith.constant dense<0.000000e+00> : vector<1xf32>
      %15 = vector.multi_reduction <add>, %14, %cst_12 [1] : vector<1x128xf32> to vector<1xf32>
      %16 = vector.shape_cast %15 : vector<1xf32> to vector<1x1xf32>
      %17 = vector.broadcast %16 : vector<1x1xf32> to vector<1x128xf32>
      %18 = arith.divf %14, %17 : vector<1x128xf32>
      %c0_13 = arith.constant 0 : index
      %c0_14 = arith.constant 0 : index
      %19 = vector.load %arg3[%c0_13, %c0_14] : memref<1x128xf32, #tpu.memory_space<vmem>>, vector<1x128xf32>
      tpu.vector_store %arg3[%c0_13, %c0_14], %18 {strides = array<i32>} : memref<1x128xf32, #tpu.memory_space<vmem>>, vector<1x128xf32>,
    } else {
    }
    return
  }
  func.func @transform_0(%arg0: i32) -> (i32, i32) {
    %c0_i32 = arith.constant 0 : i32
    %c0_i32_0 = arith.constant 0 : i32
    return %arg0, %c0_i32 : i32, i32
  }
  func.func @transform_1(%arg0: i32) -> (i32, i32) {
    %c0_i32 = arith.constant 0 : i32
    %c0_i32_0 = arith.constant 0 : i32
    %c0_i32_1 = arith.constant 0 : i32
    return %c0_i32, %c0_i32_0 : i32, i32
  }
  func.func @transform_2(%arg0: i32) -> (i32, i32) {
    %c0_i32 = arith.constant 0 : i32
    %c0_i32_0 = arith.constant 0 : i32
    %c0_i32_1 = arith.constant 0 : i32
    return %c0_i32, %c0_i32_0 : i32, i32
  }
}

</mosaic_0001>

<llo_original>
// kernel: tpu_custom_call.1
$region0: #{tpu_custom_call.1}
  #allocation0 [shape = 'u32[]', space=smem, size = 0x4, offset = 0x4, fixed_abs, tag = 'smem constant byte address 0x4 - core index']
  #allocation1 [shape = 'u32[72,128]{1,0:T(1,128)}', space=vmem, size = 0x9000, scoped, tag = 'internal scratch']
  #allocation2 [shape = 'f32[1,128]{1,0:T(1,128)}', space=vmem, size = 0x200, scoped, tag = 'scratch operand']
  %s0 = inlined_call_operand.hbm [shape: f32[256,128], index: 0, kind: input, shape index: {}]
  %s1 = inlined_call_operand.hbm [shape: f32[128,128], index: 1, kind: input, shape index: {}]
  %s2 = inlined_call_operand.hbm [shape: f32[1,128], index: 2, kind: output, shape index: {}]
  %s3 = sld [smem:[#allocation0]]
  $region57: #{tpu_custom_call.1} parent=0
    _
  %s5 = ssub.s32 1, %s3
  %s6 = scalar_select 0, %s5, %s3
  $region1: #{tpu_custom_call.1} parent=0
    #allocation3 [shape = 'u8[65536]{0}', space=vmem, size = 0x10000, scoped, tag = 'input window, operand 0']
    #allocation4 [shape = 's32[2]{0}', space=sflag, size = 0x8, scoped, tag = 'scoped memory for tpu_custom_call.1']
    #allocation5 [shape = 's32[2]{0}', space=sflag, size = 0x8, scoped, tag = 'scoped memory for tpu_custom_call.1']
    #allocation6 [shape = 'u8[65536]{0}', space=vmem, size = 0x10000, scoped, tag = 'input window, operand 1, single buffered']
    #allocation7 [shape = 's32[1]{0}', space=sflag, size = 0x4, scoped, tag = 'scoped memory for tpu_custom_call.1']
    #allocation8 [shape = 'u8[512]{0}', space=vmem, size = 0x400, scoped, tag = 'output window, operand 0, single buffered']
    %7 = vsyncpa [#allocation4], 0
    %s8 = scalar_lea.sflag [#allocation4], 1
    %9 = vsyncpa %s8, 0
    %10 = vsyncpa [#allocation7], 0
    %11 = vsyncpa [#allocation5], 0
    loop: start=0, step=1, limit=6
    $region2: #{tpu_custom_call.1} parent=1 // loop_pre_header
      _
    $region3: #{tpu_custom_call.1} parent=1 // loop_header
      %s13 = sphi 0, %s17
      %p14 = scmp.ge.s32.totalorder %s13, 6
      %s23 = sphi 0, %s25
      %s26 = sphi 0, %s23
      %s27 = sphi 0, %s26
      %s43 = sphi 0, %s27
      %s47 = sphi 0, %s47
      %s49 = sphi 0, %s47
      %s50 = sphi 0, %s49
      %s64 = sphi 0, %s50
      %s68 = sphi 0, %s68
      %s70 = sphi 0, %s68
      %s71 = sphi 0, %s70
      %s85 = sphi 0, %s71
    $region4: #{tpu_custom_call.1} parent=1 // loop_header_branch
      %16 = sbr.rel (%p14) target = $region8
    $region5: #{tpu_custom_call.1} parent=1 // loop_body
      %s18 = ssub.s32 %s13, 1
      %s19 = ssub.s32 %s13, 2
      %s20 = sadd.s32 %s13, 1
      %s21 = ssub.s32 %s13, %s20
      %p22 = scmp.eq.s32.totalorder %s21, 0
      %s24 = sadd.s32 %s23, 1
      %s25 = scalar_select %p22, %s23, %s24
      %p28 = pneg %p22
      %p29 = scmp.eq.s32.totalorder %s13, 3
      %p30 = por %p28, %p29
      %p31 = scmp.ne.s32.totalorder %s23, %s26
      %p32 = scmp.eq.s32.totalorder %s13, 0
      %p33 = por %p31, %p32
      %p34 = scmp.ne.s32.totalorder %s23, %s26
      %p35 = scmp.eq.s32.totalorder %s18, 3
      %p36 = por %p34, %p35
      %p37 = scmp.ne.s32.totalorder %s26, %s27
      %p38 = scmp.eq.s32.totalorder %s18, 0
      %p39 = por %p37, %p38
      %p40 = scmp.ne.s32.totalorder %s26, %s27
      %p41 = scmp.eq.s32.totalorder %s19, 3
      %p42 = por %p40, %p41
      %p44 = scmp.ne.s32.totalorder %s27, %s43
      %p45 = scmp.eq.s32.totalorder %s19, 0
      %p46 = por %p44, %p45
      %s48 = sadd.s32 %s47, 1
      %p51 = scmp.eq.s32.totalorder %s13, 3
      %p52 = scmp.ne.s32.totalorder %s47, %s49
      %p53 = scmp.eq.s32.totalorder %s13, 0
      %p54 = por %p52, %p53
      %p55 = scmp.ne.s32.totalorder %s47, %s49
      %p56 = scmp.eq.s32.totalorder %s18, 3
      %p57 = por %p55, %p56
      %p58 = scmp.ne.s32.totalorder %s49, %s50
      %p59 = scmp.eq.s32.totalorder %s18, 0
      %p60 = por %p58, %p59
      %p61 = scmp.ne.s32.totalorder %s49, %s50
      %p62 = scmp.eq.s32.totalorder %s19, 3
      %p63 = por %p61, %p62
      %p65 = scmp.ne.s32.totalorder %s50, %s64
      %p66 = scmp.eq.s32.totalorder %s19, 0
      %p67 = por %p65, %p66
      %s69 = sadd.s32 %s68, 1
      %p72 = scmp.eq.s32.totalorder %s13, 3
      %p73 = scmp.ne.s32.totalorder %s68, %s70
      %p74 = scmp.eq.s32.totalorder %s13, 0
      %p75 = por %p73, %p74
      %p76 = scmp.ne.s32.totalorder %s68, %s70
      %p77 = scmp.eq.s32.totalorder %s18, 3
      %p78 = por %p76, %p77
      %p79 = scmp.ne.s32.totalorder %s70, %s71
      %p80 = scmp.eq.s32.totalorder %s18, 0
      %p81 = por %p79, %p80
      %p82 = scmp.ne.s32.totalorder %s70, %s71
      %p83 = scmp.eq.s32.totalorder %s19, 3
      %p84 = por %p82, %p83
      %p86 = scmp.ne.s32.totalorder %s71, %s85
      %p87 = scmp.eq.s32.totalorder %s19, 0
      %p88 = por %p86, %p87
      %p89 = scmp.le.s32.totalorder 1, %s13
      %p90 = scmp.lt.s32.totalorder %s13, 5
      %p91 = pnand %p89, %p90
      %p92 = pneg %p91
      // Predicated region
      $region9: #{tpu_custom_call.1} parent=5 // pred_check
        _
      $region10: #{tpu_custom_call.1} parent=5 // pred_check_branch
        %94 = sbr.rel (%p91) target = $region12
      $region11: #{tpu_custom_call.1} parent=5 // pred_region
        %s95 = ssub.s32 %s13, 1
        // Predicated region
        $region13: #{tpu_custom_call.1} parent=11 // pred_check
          %p96 = pneg %p60
        $region14: #{tpu_custom_call.1} parent=11 // pred_check_branch
          %98 = sbr.rel (%p96) target = $region16
        $region15: #{tpu_custom_call.1} parent=11 // pred_region
          %100 = vsyncadd [#allocation7], 0
          %s101 = sshll.u32 %s1, 4
          %s102 = int_to_ptr.hbm [resolvable:$true] %s101
          %s103 = sshll.u32 [#allocation6], 4
          %s104 = int_to_ptr.vmem [resolvable:$true] %s103
          %109 = dma.hbm_to_vmem [thread:$0]  %s102, 2048, %s104, [#allocation7], 128, 128, 8
        $region16: #{tpu_custom_call.1} parent=11 // pred_fallthru
          _
      $region12: #{tpu_custom_call.1} parent=5 // pred_fallthru
        _
      %p110 = scmp.lt.s32.totalorder %s13, 4
      // Predicated region
      $region17: #{tpu_custom_call.1} parent=5 // pred_check
        %p111 = pneg %p110
      $region18: #{tpu_custom_call.1} parent=5 // pred_check_branch
        %113 = sbr.rel (%p111) target = $region20
      $region19: #{tpu_custom_call.1} parent=5 // pred_region
        // Predicated region
        $region21: #{tpu_custom_call.1} parent=19 // pred_check
          %p114 = pneg %p33
        $region22: #{tpu_custom_call.1} parent=19 // pred_check_branch
          %116 = sbr.rel (%p114) target = $region24
        $region23: #{tpu_custom_call.1} parent=19 // pred_region
          %s117 = sand.u32 %s23, 1
          %s118 = scalar_lea.sflag [#allocation4], %s117
          %s119 = sand.u32 %s23, 1
          %s120 = smul.addr %s119, 64
          %s121 = scalar_lea.vmem [#allocation3], %s120
          %s122 = smul.u32 8, %s13
          %124 = vsyncadd %s118, 0
          %s125 = smul.addr %s122, 8
          %s126 = scalar_lea.hbm %s0, %s125
          %s127 = sshll.u32 %s126, 4
          %s128 = int_to_ptr.hbm [resolvable:$true] %s127
          %s129 = sshll.u32 %s121, 4
          %s130 = int_to_ptr.vmem [resolvable:$true] %s129
          %135 = dma.hbm_to_vmem [thread:$0]  %s128, 1024, %s130, %s118, 128, 128, 8
        $region24: #{tpu_custom_call.1} parent=19 // pred_fallthru
          _
      $region20: #{tpu_custom_call.1} parent=5 // pred_fallthru
        _
      %p136 = scmp.le.s32.totalorder 1, %s13
      %p137 = scmp.lt.s32.totalorder %s13, 5
      %p138 = pnand %p136, %p137
      %p139 = pneg %p138
      // Predicated region
      $region25: #{tpu_custom_call.1} parent=5 // pred_check
        _
      $region26: #{tpu_custom_call.1} parent=5 // pred_check_branch
        %141 = sbr.rel (%p138) target = $region28
      $region27: #{tpu_custom_call.1} parent=5 // pred_region
        %s142 = ssub.s32 %s13, 1
        %s143 = sand.u32 %s26, 1
        %s144 = scalar_lea.sflag [#allocation4], %s143
        %s145 = sand.u32 %s26, 1
        %s146 = smul.addr %s145, 64
        %s147 = scalar_lea.vmem [#allocation3], %s146
        // Predicated region
        $region29: #{tpu_custom_call.1} parent=27 // pred_check
          %p148 = pneg %p39
        $region30: #{tpu_custom_call.1} parent=27 // pred_check_branch
          %150 = sbr.rel (%p148) target = $region32
        $region31: #{tpu_custom_call.1} parent=27 // pred_region
          %152 = dma.done %s144, 1024
        $region32: #{tpu_custom_call.1} parent=27 // pred_fallthru
          _
        // Predicated region
        $region33: #{tpu_custom_call.1} parent=27 // pred_check
          %p153 = pneg %p60
        $region34: #{tpu_custom_call.1} parent=27 // pred_check_branch
          %155 = sbr.rel (%p153) target = $region36
        $region35: #{tpu_custom_call.1} parent=27 // pred_region
          %157 = dma.done [#allocation7], 2048
        $region36: #{tpu_custom_call.1} parent=27 // pred_fallthru
          _
        %s158 = sand.u32 %s26, 1
        %s159 = scalar_lea.sflag [#allocation4], %s158
        %s160 = sand.u32 %s26, 1
        %s161 = smul.addr %s160, 64
        %s162 = scalar_lea.vmem [#allocation3], %s161
        %p163 = pneg %p39
        %p164 = pneg %p36
        %p165 = pneg %p60
        %p166 = pneg %p57
        %p167 = pneg %p81
        %p168 = pneg %p78
        %s169 = smul.u32 8, %s18
        %p170 = scmp.eq.s32.totalorder %s18, 0
        // Predicated region
        $region37: #{tpu_custom_call.1} parent=27 // pred_check
          %p171 = pneg %p170
        $region38: #{tpu_custom_call.1} parent=27 // pred_check_branch
          %173 = sbr.rel (%p171) target = $region40
        $region39: #{tpu_custom_call.1} parent=27 // pred_region
          %174 = vst [vmem:[#allocation2] sm:$0x1] 0.0
          %175 = vst [vmem:[#allocation8] sm:$0x1] 0.0
        $region40: #{tpu_custom_call.1} parent=27 // pred_fallthru
          _
        %v176 = vld [vmem:[%s147] sm:$0xff]
        %v177 = vld [vmem:[%s147 + $0x8] sm:$0xff]
        %v178 = vld [vmem:[%s147 + $0x10] sm:$0xff]
        %v179 = vld [vmem:[%s147 + $0x18] sm:$0xff]
        %v180 = vld [vmem:[%s147 + $0x20] sm:$0xff]
        %v181 = vld [vmem:[%s147 + $0x28] sm:$0xff]
        %v182 = vld [vmem:[%s147 + $0x30] sm:$0xff]
        %v183 = vld [vmem:[%s147 + $0x38] sm:$0xff]
        %v184 = vld [vmem:[#allocation2] sm:$0x1]
        %v185 = vadd.f32 %v176, %v177
        %v186 = vadd.f32 %v185, %v178
        %v187 = vadd.f32 %v186, %v179
        %v188 = vadd.f32 %v187, %v180
        %v189 = vadd.f32 %v188, %v181
        %v190 = vadd.f32 %v189, %v182
        %v191 = vadd.f32 %v190, %v183
        %v192 = vrot.slane %v191, 4
        %v193 = vadd.f32 %v191, %v192
        %v194 = vrot.slane %v193, 2
        %v195 = vadd.f32 %v193, %v194
        %v196 = vrot.slane %v195, 1
        %v197 = vadd.f32 %v195, %v196
        %v198 = vadd.f32 %v184, %v197
        %199 = vst [vmem:[#allocation2] sm:$0x1] %v198
        %p200 = scmp.eq.s32.totalorder %s18, 3
        // Predicated region
        $region41: #{tpu_custom_call.1} parent=27 // pred_check
          %p201 = pneg %p200
        $region42: #{tpu_custom_call.1} parent=27 // pred_check_branch
          %203 = sbr.rel (%p201) target = $region44
        $region43: #{tpu_custom_call.1} parent=27 // pred_region
          %v204 = vld [vmem:[#allocation2] sm:$0x1]
          %v205 = vld [vmem:[#allocation6] sm:$0xff]
          %v206 = vld [vmem:[#allocation6 + $0x8] sm:$0xff]
          %v207 = vld [vmem:[#allocation6 + $0x10] sm:$0xff]
          %v208 = vld [vmem:[#allocation6 + $0x18] sm:$0xff]
          %v209 = vld [vmem:[#allocation6 + $0x20] sm:$0xff]
          %v210 = vld [vmem:[#allocation6 + $0x28] sm:$0xff]
          %v211 = vld [vmem:[#allocation6 + $0x30] sm:$0xff]
          %v212 = vld [vmem:[#allocation6 + $0x38] sm:$0xff]
          %v213 = vld [vmem:[#allocation6 + $0x40] sm:$0xff]
          %v214 = vld [vmem:[#allocation6 + $0x48] sm:$0xff]
          %v215 = vld [vmem:[#allocation6 + $0x50] sm:$0xff]
          %v216 = vld [vmem:[#allocation6 + $0x58] sm:$0xff]
          %v217 = vld [vmem:[#allocation6 + $0x60] sm:$0xff]
          %v218 = vld [vmem:[#allocation6 + $0x68] sm:$0xff]
          %v219 = vld [vmem:[#allocation6 + $0x70] sm:$0xff]
          %v220 = vld [vmem:[#allocation6 + $0x78] sm:$0xff]
          %221 = vmatpush.msra.mxu0 %v220
          %222 = vmatpush.msra.mxu0 %v219
          %223 = vmatpush.msra.mxu0 %v218
          %224 = vmatpush.msra.mxu0 %v217
          %225 = vmatpush.msra.mxu0 %v216
          %226 = vmatpush.msra.mxu0 %v215
          %227 = vmatpush.msra.mxu0 %v214
          %228 = vmatpush.msra.mxu0 %v213
          %229 = vmatpush.msra.mxu0 %v212
          %230 = vmatpush.msra.mxu0 %v211
          %231 = vmatpush.msra.mxu0 %v210
          %232 = vmatpush.msra.mxu0 %v209
          %233 = vmatpush.msra.mxu0 %v208
          %234 = vmatpush.msra.mxu0 %v207
          %235 = vmatpush.msra.mxu0 %v206
          %236 = vmatpush.msra.mxu0 %v205
          %237 = vmatmul.f32.gmra.mxu0 %v204
          %v238 = vpop.f32.mrf.mxu0
          %v239 = vadd.f32 0.0, %v238
          %240 = vdwg.mxu0
          %vm241 = vcmask 1040384
          %v242 = vsel %vm241, %v239, 0.0
          %243 = vadd.xlane.f32.xlu0 %v242
          %v244 = vpop.xlane.xlu0 %243
          %v245 = vrcp.pop %v244
          %v246 = vmul.f32 %v244, %v245
          %v247 = vsub.f32 1.0, %v246
          %v248 = vmul.f32 %v245, %v247
          %v249 = vadd.f32 %v245, %v248
          %vm250 = vweird.f32 %v244
          %vm251 = vweird.f32 %v245
          %vm252 = vmor %vm250, %vm251
          %v253 = vsel %vm252, %v245, %v249
          %v254 = vand.u32 2147483647, %v244
          %vm255 = vcmp.eq.f32.partialorder %v254, 8.507059e+37
          %v256 = vand.u32 %v244, 2147483648
          %v257 = vor.u32 1.1754944e-38, %v256
          %v258 = vsel %vm255, %v257, %v253
          %v259 = vmul.f32 %v239, %v258
          %260 = vst [vmem:[#allocation8] sm:$0x1] %v259
        $region44: #{tpu_custom_call.1} parent=27 // pred_fallthru
          _
        // Predicated region
        $region45: #{tpu_custom_call.1} parent=27 // pred_check
          %p261 = pneg %p78
        $region46: #{tpu_custom_call.1} parent=27 // pred_check_branch
          %263 = sbr.rel (%p261) target = $region48
        $region47: #{tpu_custom_call.1} parent=27 // pred_region
          %265 = vsyncadd [#allocation5], 0
          %s267 = sshll.u32 [#allocation8], 4
          %s268 = int_to_ptr.vmem [resolvable:$true] %s267
          %s269 = sshll.u32 %s2, 4
          %s270 = int_to_ptr.hbm [resolvable:$true] %s269
          %272 = dma.vmem_to_hbm [thread:$0]  %s268, 16, %s270, [#allocation5]
        $region48: #{tpu_custom_call.1} parent=27 // pred_fallthru
          _
        // Predicated region
        $region49: #{tpu_custom_call.1} parent=27 // pred_check
          %p273 = pneg %p78
        $region50: #{tpu_custom_call.1} parent=27 // pred_check_branch
          %275 = sbr.rel (%p273) target = $region52
        $region51: #{tpu_custom_call.1} parent=27 // pred_region
          %277 = dma.done [#allocation5], 16
        $region52: #{tpu_custom_call.1} parent=27 // pred_fallthru
          _
      $region28: #{tpu_custom_call.1} parent=5 // pred_fallthru
        _
      %p278 = scmp.le.s32.totalorder 2, %s13
      // Predicated region
      $region53: #{tpu_custom_call.1} parent=5 // pred_check
        %p279 = pneg %p278
      $region54: #{tpu_custom_call.1} parent=5 // pred_check_branch
        %281 = sbr.rel (%p279) target = $region56
      $region55: #{tpu_custom_call.1} parent=5 // pred_region
        %s282 = ssub.s32 %s13, 2
      $region56: #{tpu_custom_call.1} parent=5 // pred_fallthru
        _
    $region6: #{tpu_custom_call.1} parent=1 // loop_footer
      %s17 = sadd.s32 1, %s13
    $region7: #{tpu_custom_call.1} parent=1 // loop_footer_branch
      %12 = sbr.rel target = $region3
    $region8: #{tpu_custom_call.1} parent=1 // loop_exit
      _
    %283 = vsyncpa [#allocation4], 1
    %s284 = scalar_lea.sflag [#allocation4], 1
    %285 = vsyncpa %s284, 1
    %286 = vsyncpa [#allocation7], 1
    %287 = vsyncpa [#allocation5], 1
    %s288 = scalar_lea.sflag [#allocation5], 1
    %289 = vsyncpa %s288, 1

</llo_original>
